<compile_context>
chip_gen: v7x
topology: tpu7x:2x2x1
jax: 0.10.0
libtpu: 0.0.40
codegen_flags: <defaults>
</compile_context>

<pallas_src>
import functools
import math

import jax
import jax.numpy as jnp
from jax.experimental import pallas as pl
from jax.experimental.pallas import tpu as pltpu


# ----------------------------- VMEM / compiler params ------------------------

def _derive_vmem_limit():
    # Generation-aware: ~96 MiB on v5e/v6e (128 MiB physical), ~48 MiB on v7x
    # (64 MiB physical) instead of a fixed 32 MiB cap.
    try:
        cap = int(pltpu.get_tpu_info().vmem_capacity_bytes)
    except Exception:
        cap = 128 * 1024 * 1024
    return min((cap * 3) // 4, 100 * 1024 * 1024)


_VMEM_LIMIT_BYTES = _derive_vmem_limit()


def _compiler_params(dimension_semantics):
    return pltpu.CompilerParams(dimension_semantics=dimension_semantics,
                                vmem_limit_bytes=_VMEM_LIMIT_BYTES)


# ----------------------------- BlockSpec helpers -----------------------------

def _zeros_index_map(ndim):
    zeros = (0,) * ndim
    return lambda *args: zeros


try:  # constant-index weights: single VMEM buffer (no double-buffering needed)
    _SINGLE_BUFFERED = pl.Buffered(1)
    pl.BlockSpec((8, 128), _zeros_index_map(2), pipeline_mode=_SINGLE_BUFFERED)
except Exception:  # fall back to default buffering on older APIs
    _SINGLE_BUFFERED = None


def _weight_spec(a):
    imap = _zeros_index_map(a.ndim)
    if _SINGLE_BUFFERED is not None:
        return pl.BlockSpec(a.shape, imap, pipeline_mode=_SINGLE_BUFFERED)
    return pl.BlockSpec(a.shape, imap)


def _pick_row_block(rows, max_rows=512):
    """Largest multiple-of-8 divisor of `rows` <= max_rows (else full rows)."""
    best = None
    for blk in range(8, min(rows, max_rows) + 1, 8):
        if rows % blk == 0:
            best = blk
    return best if best is not None else rows


# ----------------------------- in-kernel helpers -----------------------------

def _layer_norm(x, w, b, eps=1e-5):
    # f32 statistics (required for parity when matmuls run in bf16).
    mu = jnp.mean(x, axis=-1, keepdims=True)
    var = jnp.mean((x - mu) ** 2, axis=-1, keepdims=True)
    return (x - mu) * jax.lax.rsqrt(var + eps) * w + b


# ---------------- kernel 1: LayerNorm1 + fused QKV (head-major out) ----------

def ln_qkv_kernel(x_ref, ln_w_ref, ln_b_ref, wqkv_ref, bqkv_ref,
                  q_ref, k_ref, v_ref, *, n_heads, head_dim):
    x = x_ref[0].astype(jnp.float32)                      # (t_blk, E)
    nx = _layer_norm(x, ln_w_ref[0], ln_b_ref[0])
    qkv = jnp.dot(nx.astype(jnp.bfloat16), wqkv_ref[...],
                  preferred_element_type=jnp.float32) + bqkv_ref[0]  # (t_blk, 3E)
    E = n_heads * head_dim
    # Head-major stores (static slices / indices): avoids a wrapper-side XLA
    # transpose that would cost two extra full-activation HBM passes.
    for h in range(n_heads):
        lo = h * head_dim
        hi = lo + head_dim
        q_ref[0, h] = qkv[:, lo:hi].astype(q_ref.dtype)
        k_ref[0, h] = qkv[:, E + lo:E + hi].astype(k_ref.dtype)
        v_ref[0, h] = qkv[:, 2 * E + lo:2 * E + hi].astype(v_ref.dtype)


def _ln_qkv(x, ln_w, ln_b, wqkv, bqkv, *, n_heads):
    B, T, E = x.shape
    hd = E // n_heads
    t_blk = _pick_row_block(T)
    x_spec = pl.BlockSpec((1, t_blk, E), lambda b, tt: (b, tt, 0))
    out_spec = pl.BlockSpec((1, n_heads, t_blk, hd), lambda b, tt: (b, 0, tt, 0))
    out_sds = jax.ShapeDtypeStruct((B, n_heads, T, hd), jnp.bfloat16)
    kernel = functools.partial(ln_qkv_kernel, n_heads=n_heads, head_dim=hd)
    return pl.pallas_call(
        kernel,
        out_shape=(out_sds, out_sds, out_sds),
        grid=(B, T // t_blk),
        in_specs=[x_spec, _weight_spec(ln_w), _weight_spec(ln_b),
                  _weight_spec(wqkv), _weight_spec(bqkv)],
        out_specs=(out_spec, out_spec, out_spec),
        compiler_params=_compiler_params(("parallel", "parallel")),
    )(x, ln_w, ln_b, wqkv, bqkv)


# -------------- kernel 2: causal attention with fused output projection ------

def attention_kernel(q_ref, k_ref, v_ref, woh_ref, bo_ref, out_ref, acc_ref):
    h = pl.program_id(1)

    q = q_ref[0, 0]                                        # (T, hd) bf16
    k = k_ref[0, 0]
    v = v_ref[0, 0]
    T = q.shape[0]

    # Scale 1/sqrt(hd) is pre-folded into the Q projection weights.
    s = jnp.einsum("qd,kd->qk", q, k,
                   preferred_element_type=jnp.float32)     # (T, T) f32

    row = jax.lax.broadcasted_iota(jnp.int32, (T, T), 0)
    col = jax.lax.broadcasted_iota(jnp.int32, (T, T), 1)
    s = jnp.where(col <= row, s, jnp.float32(-1e30))

    m = jnp.max(s, axis=-1, keepdims=True)
    e = jnp.exp(s - m)
    p = e * pl.reciprocal(jnp.sum(e, axis=-1, keepdims=True), approx=True)

    ctx = jnp.dot(p.astype(v.dtype), v,
                  preferred_element_type=jnp.float32)      # (T, hd) f32
    part = jnp.dot(ctx.astype(jnp.bfloat16), woh_ref[0],
                   preferred_element_type=jnp.float32)     # (T, E) f32

    @pl.when(h == 0)
    def _():
        acc_ref[...] = jnp.zeros_like(acc_ref)

    acc_ref[...] += part

    @pl.when(h == pl.num_programs(1) - 1)
    def _():
        out_ref[0] = (acc_ref[...] + bo_ref[...]).astype(out_ref.dtype)


def _attention(q, k, v, wo_heads, bo):
    B, H, T, hd = q.shape
    E = H * hd
    qkv_spec = pl.BlockSpec((1, 1, T, hd), lambda b, h: (b, h, 0, 0))
    return pl.pallas_call(
        attention_kernel,
        out_shape=jax.ShapeDtypeStruct((B, T, E), jnp.bfloat16),
        grid=(B, H),
        in_specs=[qkv_spec, qkv_spec, qkv_spec,
                  pl.BlockSpec((1, hd, E), lambda b, h: (h, 0, 0)),
                  _weight_spec(bo)],
        out_specs=pl.BlockSpec((1, T, E), lambda b, h: (b, 0, 0)),
        scratch_shapes=[pltpu.VMEM((T, E), jnp.float32)],
        compiler_params=_compiler_params(("parallel", "arbitrary")),
    )(q, k, v, wo_heads, bo)


# ---------------- kernel 3: residual + LayerNorm2 + MLP (+ residual) ---------

def mlp_kernel(x_ref, attn_ref, ln2w_ref, ln2b_ref, w1_ref, b1_ref,
               w2_ref, b2_ref, out_ref, *, with_residuals):
    attn = attn_ref[...].astype(jnp.float32)
    # dropout1 / dropout2 are identity in eval mode.
    if with_residuals:
        x1 = x_ref[...].astype(jnp.float32) + attn
        nx2 = _layer_norm(x1, ln2w_ref[0], ln2b_ref[0])
        h1 = jax.nn.gelu(
            jnp.dot(nx2.astype(jnp.bfloat16), w1_ref[...],
                    preferred_element_type=jnp.float32) + b1_ref[0],
            approximate=False)  # exact erf GELU for torch parity
        mlp_o = jnp.dot(h1.astype(jnp.bfloat16), w2_ref[...],
                        preferred_element_type=jnp.float32) + b2_ref[0]
        out = x1 + mlp_o
    else:
        nx2 = _layer_norm(attn, ln2w_ref[0], ln2b_ref[0])
        h1 = jax.nn.gelu(
            jnp.dot(nx2.astype(jnp.bfloat16), w1_ref[...],
                    preferred_element_type=jnp.float32) + b1_ref[0],
            approximate=False)
        out = jnp.dot(h1.astype(jnp.bfloat16), w2_ref[...],
                      preferred_element_type=jnp.float32) + b2_ref[0]
    out_ref[...] = out.astype(out_ref.dtype)


def _mlp(x2d, attn2d, p, *, with_residuals):
    rows, E = x2d.shape
    r_blk = _pick_row_block(rows)
    weights = [p["ln2_w"], p["ln2_b"], p["w1"], p["b1"], p["w2"], p["b2"]]
    kernel = functools.partial(mlp_kernel, with_residuals=with_residuals)
    row_spec = pl.BlockSpec((r_blk, E), lambda i: (i, 0))
    return pl.pallas_call(
        kernel,
        out_shape=jax.ShapeDtypeStruct((rows, E), jnp.float32),
        grid=(rows // r_blk,),
        in_specs=[row_spec, row_spec] + [_weight_spec(a) for a in weights],
        out_specs=row_spec,
        compiler_params=_compiler_params(("parallel",)),
    )(x2d, attn2d, *weights)


# ------------------------------- block forward --------------------------------

def transformer_decoder_block(x, p, *, n_heads, with_residuals):
    """Equivalent of TransformerDecoderBlock.forward (eval mode, no attn return)."""
    B, T, E = x.shape
    hd = E // n_heads
    rows = B * T

    # Kernel 1: LN1 + fused QKV -> head-major q/k/v (no XLA transposes).
    q, k, v = _ln_qkv(x, p["ln1_w"], p["ln1_b"], p["wqkv"], p["bqkv"],
                      n_heads=n_heads)                      # (B, H, T, hd) bf16

    # Kernel 2: causal attention with Wo fused in; lane-dense (B, T, E) output.
    wo_heads = p["wo"].reshape(n_heads, hd, E)              # free reshape
    attn = _attention(q, k, v, wo_heads, p["bo"])           # (B, T, E) bf16

    # Kernel 3: residual + LN2 + MLP (+ residual).
    x2d = x.reshape(rows, E)
    attn2d = attn.reshape(rows, E)                          # free reshape
    out2d = _mlp(x2d, attn2d, p, with_residuals=with_residuals)
    return out2d.reshape(B, T, E)


# ------------------------------ parameter setup --------------------------------

def _xavier_uniform(key, shape):
    # torch.nn.init.xavier_uniform_ on a 2-D (out, in) weight.
    fan_out, fan_in = shape
    bound = math.sqrt(6.0 / (fan_in + fan_out))
    return jax.random.uniform(key, shape, jnp.float32, -bound, bound)


def init_block_params(key, *, embed_size, mlp_hidden_size, n_heads):
    E, Hm = embed_size, mlp_hidden_size
    hd = E // n_heads
    keys = iter(jax.random.split(key, 8))
    # Linear weights stored (in, out) so kernels compute y = x @ W + b.
    wq = _xavier_uniform(next(keys), (E, E)).T
    wk = _xavier_uniform(next(keys), (E, E)).T
    wv = _xavier_uniform(next(keys), (E, E)).T
    wo = _xavier_uniform(next(keys), (E, E)).T
    w1 = _xavier_uniform(next(keys), (Hm, E)).T   # (E, Hm)
    w2 = _xavier_uniform(next(keys), (E, Hm)).T   # (Hm, E)
    # Fold the attention scale 1/sqrt(hd) into the Q projection (its bias is
    # zero, so only the weight needs scaling).  Removes a per-program H*T^2
    # f32 VALU multiply in the attention kernel.
    wq = wq * (1.0 / math.sqrt(hd))
    return {
        "ln1_w": jnp.ones((1, E), jnp.float32),
        "ln1_b": jnp.zeros((1, E), jnp.float32),
        # Fused QKV weight (E, 3E) in bf16; biases stay f32.
        "wqkv": jnp.concatenate([wq, wk, wv], axis=1).astype(jnp.bfloat16),
        "bqkv": jnp.zeros((1, 3 * E), jnp.float32),
        "wo": wo.astype(jnp.bfloat16),
        "bo": jnp.zeros((1, E), jnp.float32),
        "ln2_w": jnp.ones((1, E), jnp.float32),
        "ln2_b": jnp.zeros((1, E), jnp.float32),
        "w1": w1.astype(jnp.bfloat16),
        "b1": jnp.zeros((1, Hm), jnp.float32),
        "w2": w2.astype(jnp.bfloat16),
        "b2": jnp.zeros((1, E), jnp.float32),
    }


# ------------------------------ pure-JAX reference ------------------------------

def _reference_block(x, p, *, n_heads, with_residuals):
    """f32 reference using the same (bf16-stored) weights. Scale is pre-folded
    into wqkv's Q columns, so no extra 1/sqrt(hd) here."""
    B, T, E = x.shape
    hd = E // n_heads
    f32 = jnp.float32

    def ln(v, w, b, eps=1e-5):
        mu = jnp.mean(v, axis=-1, keepdims=True)
        var = jnp.mean((v - mu) ** 2, axis=-1, keepdims=True)
        return (v - mu) / jnp.sqrt(var + eps) * w + b

    nx = ln(x, p["ln1_w"][0], p["ln1_b"][0])
    qkv = nx @ p["wqkv"].astype(f32) + p["bqkv"][0]
    q, k, v = jnp.split(qkv, 3, axis=-1)
    q = q.reshape(B, T, n_heads, hd).transpose(0, 2, 1, 3)
    k = k.reshape(B, T, n_heads, hd).transpose(0, 2, 1, 3)
    v = v.reshape(B, T, n_heads, hd).transpose(0, 2, 1, 3)
    s = jnp.einsum("bhqd,bhkd->bhqk", q, k)
    mask = jnp.tril(jnp.ones((T, T), dtype=bool))
    s = jnp.where(mask, s, -jnp.inf)
    probs = jax.nn.softmax(s, axis=-1)
    ctx = jnp.einsum("bhqk,bhkd->bhqd", probs, v)
    ctx = ctx.transpose(0, 2, 1, 3).reshape(B, T, E)
    attn = ctx @ p["wo"].astype(f32) + p["bo"][0]

    def mlp(h):
        h1 = jax.nn.gelu(h @ p["w1"].astype(f32) + p["b1"][0], approximate=False)
        return h1 @ p["w2"].astype(f32) + p["b2"][0]

    if with_residuals:
        x1 = x + attn
        return x1 + mlp(ln(x1, p["ln2_w"][0], p["ln2_b"][0]))
    return mlp(ln(attn, p["ln2_w"][0], p["ln2_b"][0]))


# ----------------------------------- main ---------------------------------------

if __name__ == "__main__":
    n_heads = 2
    embed_size = 32
    mlp_hidden_size = 64
    max_context_len = 16   # causal mask derived from T (T <= max_context_len)
    B, T = 2, 8

    key = jax.random.PRNGKey(0)
    pkey, xkey = jax.random.split(key)
    params = init_block_params(pkey, embed_size=embed_size,
                               mlp_hidden_size=mlp_hidden_size, n_heads=n_heads)
    x = jax.random.normal(xkey, (B, T, embed_size), jnp.float32)

    out_res = jax.block_until_ready(
        transformer_decoder_block(x, params, n_heads=n_heads, with_residuals=True))
    out_plain = jax.block_until_ready(
        transformer_decoder_block(x, params, n_heads=n_heads, with_residuals=False))

    ref_res = _reference_block(x, params, n_heads=n_heads, with_residuals=True)
    ref_plain = _reference_block(x, params, n_heads=n_heads, with_residuals=False)

    assert out_res.shape == (B, T, embed_size)
    assert out_plain.shape == (B, T, embed_size)
    assert bool(jnp.all(jnp.isfinite(out_res)))
    assert bool(jnp.all(jnp.isfinite(out_plain)))
    # bf16 matmuls / bf16 inter-kernel activations / approx reciprocal -> loose tol.
    assert bool(jnp.allclose(out_res, ref_res, atol=0.15, rtol=0.05))
    assert bool(jnp.allclose(out_plain, ref_plain, atol=0.15, rtol=0.05))
    print("KERNEL_OK")
</pallas_src>

<mosaic_0001>
module attributes {stable_mosaic.version = 11 : i64} {
  func.func @ln_qkv_kernel(%arg0: i32, %arg1: i32, %arg2: memref<1x8x32xf32, #tpu.memory_space<vmem>>, %arg3: memref<1x32xf32, #tpu.memory_space<vmem>>, %arg4: memref<1x32xf32, #tpu.memory_space<vmem>>, %arg5: memref<32x96xbf16, #tpu.memory_space<vmem>>, %arg6: memref<1x96xf32, #tpu.memory_space<vmem>>, %arg7: memref<1x2x8x16xbf16, #tpu.memory_space<vmem>>, %arg8: memref<1x2x8x16xbf16, #tpu.memory_space<vmem>>, %arg9: memref<1x2x8x16xbf16, #tpu.memory_space<vmem>>) attributes {dimension_semantics = [#tpu.dimension_semantics<parallel>, #tpu.dimension_semantics<parallel>], iteration_bounds = array<i64: 2, 1>, scalar_prefetch = 0 : i64, scratch_operands = 0 : i64, tpu.core_type = #tpu.core_type<tc>, window_params = [{transform_indices = @transform_0, window_bounds = array<i64: 1, 8, 32>}, {pipeline_mode = #tpu.pipeline_mode<synchronous>, transform_indices = @transform_1, window_bounds = array<i64: 1, 32>}, {pipeline_mode = #tpu.pipeline_mode<synchronous>, transform_indices = @transform_2, window_bounds = array<i64: 1, 32>}, {pipeline_mode = #tpu.pipeline_mode<synchronous>, transform_indices = @transform_3, window_bounds = array<i64: 32, 96>}, {pipeline_mode = #tpu.pipeline_mode<synchronous>, transform_indices = @transform_4, window_bounds = array<i64: 1, 96>}, {transform_indices = @transform_5, window_bounds = array<i64: 1, 2, 8, 16>}, {transform_indices = @transform_6, window_bounds = array<i64: 1, 2, 8, 16>}, {transform_indices = @transform_7, window_bounds = array<i64: 1, 2, 8, 16>}]} {
    %c0 = arith.constant 0 : index
    %c0_0 = arith.constant 0 : index
    %c0_1 = arith.constant 0 : index
    %0 = vector.load %arg2[%c0, %c0_0, %c0_1] : memref<1x8x32xf32, #tpu.memory_space<vmem>>, vector<1x8x32xf32>
    %1 = vector.shape_cast %0 : vector<1x8x32xf32> to vector<8x32xf32>
    %c0_2 = arith.constant 0 : index
    %c0_3 = arith.constant 0 : index
    %2 = vector.load %arg3[%c0_2, %c0_3] : memref<1x32xf32, #tpu.memory_space<vmem>>, vector<1x32xf32>
    %3 = vector.shape_cast %2 : vector<1x32xf32> to vector<32xf32>
    %c0_4 = arith.constant 0 : index
    %c0_5 = arith.constant 0 : index
    %4 = vector.load %arg4[%c0_4, %c0_5] : memref<1x32xf32, #tpu.memory_space<vmem>>, vector<1x32xf32>
    %5 = vector.shape_cast %4 : vector<1x32xf32> to vector<32xf32>
    %cst = arith.constant dense<0.000000e+00> : vector<8xf32>
    %6 = vector.multi_reduction <add>, %1, %cst [1] : vector<8x32xf32> to vector<8xf32>
    %7 = vector.shape_cast %6 : vector<8xf32> to vector<8x1xf32>
    %cst_6 = arith.constant 3.200000e+01 : f32
    %8 = vector.broadcast %cst_6 : f32 to vector<8x1xf32>
    %9 = arith.divf %7, %8 : vector<8x1xf32>
    %10 = vector.broadcast %9 : vector<8x1xf32> to vector<8x32xf32>
    %11 = arith.subf %1, %10 : vector<8x32xf32>
    %12 = arith.mulf %11, %11 : vector<8x32xf32>
    %cst_7 = arith.constant dense<0.000000e+00> : vector<8xf32>
    %13 = vector.multi_reduction <add>, %12, %cst_7 [1] : vector<8x32xf32> to vector<8xf32>
    %14 = vector.shape_cast %13 : vector<8xf32> to vector<8x1xf32>
    %cst_8 = arith.constant 3.200000e+01 : f32
    %15 = vector.broadcast %cst_8 : f32 to vector<8x1xf32>
    %16 = arith.divf %14, %15 : vector<8x1xf32>
    %17 = vector.broadcast %9 : vector<8x1xf32> to vector<8x32xf32>
    %18 = arith.subf %1, %17 : vector<8x32xf32>
    %cst_9 = arith.constant 9.99999974E-6 : f32
    %19 = vector.broadcast %cst_9 : f32 to vector<8x1xf32>
    %20 = arith.addf %16, %19 : vector<8x1xf32>
    %21 = math.rsqrt %20 : vector<8x1xf32>
    %22 = vector.broadcast %21 : vector<8x1xf32> to vector<8x32xf32>
    %23 = arith.mulf %18, %22 : vector<8x32xf32>
    %24 = vector.shape_cast %3 : vector<32xf32> to vector<1x32xf32>
    %25 = vector.broadcast %24 : vector<1x32xf32> to vector<8x32xf32>
    %26 = arith.mulf %23, %25 : vector<8x32xf32>
    %27 = vector.shape_cast %5 : vector<32xf32> to vector<1x32xf32>
    %28 = vector.broadcast %27 : vector<1x32xf32> to vector<8x32xf32>
    %29 = arith.addf %26, %28 : vector<8x32xf32>
    %30 = arith.truncf %29 : vector<8x32xf32> to vector<8x32xbf16>
    %c0_10 = arith.constant 0 : index
    %c0_11 = arith.constant 0 : index
    %31 = vector.load %arg5[%c0_10, %c0_11] : memref<32x96xbf16, #tpu.memory_space<vmem>>, vector<32x96xbf16>
    %cst_12 = arith.constant dense<0.000000e+00> : vector<8x96xf32>
    %32 = tpu.matmul %30, %31, %cst_12 {dimension_numbers = #tpu.dot_dimension_numbers<[1], [0], [0], [1], [0, 0, 1, 1], [], []>} : vector<8x32xbf16>, vector<32x96xbf16>, vector<8x96xf32> -> vector<8x96xf32>
    %c0_13 = arith.constant 0 : index
    %c0_14 = arith.constant 0 : index
    %33 = vector.load %arg6[%c0_13, %c0_14] : memref<1x96xf32, #tpu.memory_space<vmem>>, vector<1x96xf32>
    %34 = vector.shape_cast %33 : vector<1x96xf32> to vector<96xf32>
    %35 = vector.shape_cast %34 : vector<96xf32> to vector<1x96xf32>
    %36 = vector.broadcast %35 : vector<1x96xf32> to vector<8x96xf32>
    %37 = arith.addf %32, %36 : vector<8x96xf32>
    %38 = vector.extract_strided_slice %37 {offsets = [0, 0], sizes = [8, 16], strides = [1, 1]} : vector<8x96xf32> to vector<8x16xf32>
    %39 = arith.truncf %38 : vector<8x16xf32> to vector<8x16xbf16>
    %c0_15 = arith.constant 0 : index
    %c0_16 = arith.constant 0 : index
    %c0_17 = arith.constant 0 : index
    %c0_18 = arith.constant 0 : index
    %40 = vector.load %arg7[%c0_15, %c0_16, %c0_17, %c0_18] : memref<1x2x8x16xbf16, #tpu.memory_space<vmem>>, vector<1x1x8x16xbf16>
    %41 = vector.shape_cast %40 : vector<1x1x8x16xbf16> to vector<8x16xbf16>
    %42 = vector.shape_cast %39 : vector<8x16xbf16> to vector<1x1x8x16xbf16>
    tpu.vector_store %arg7[%c0_15, %c0_16, %c0_17, %c0_18], %42 {strides = array<i32>} : memref<1x2x8x16xbf16, #tpu.memory_space<vmem>>, vector<1x1x8x16xbf16>,
    %43 = vector.extract_strided_slice %37 {offsets = [0, 32], sizes = [8, 16], strides = [1, 1]} : vector<8x96xf32> to vector<8x16xf32>
    %44 = arith.truncf %43 : vector<8x16xf32> to vector<8x16xbf16>
    %c0_19 = arith.constant 0 : index
    %c0_20 = arith.constant 0 : index
    %c0_21 = arith.constant 0 : index
    %c0_22 = arith.constant 0 : index
    %45 = vector.load %arg8[%c0_19, %c0_20, %c0_21, %c0_22] : memref<1x2x8x16xbf16, #tpu.memory_space<vmem>>, vector<1x1x8x16xbf16>
    %46 = vector.shape_cast %45 : vector<1x1x8x16xbf16> to vector<8x16xbf16>
    %47 = vector.shape_cast %44 : vector<8x16xbf16> to vector<1x1x8x16xbf16>
    tpu.vector_store %arg8[%c0_19, %c0_20, %c0_21, %c0_22], %47 {strides = array<i32>} : memref<1x2x8x16xbf16, #tpu.memory_space<vmem>>, vector<1x1x8x16xbf16>,
    %48 = vector.extract_strided_slice %37 {offsets = [0, 64], sizes = [8, 16], strides = [1, 1]} : vector<8x96xf32> to vector<8x16xf32>
    %49 = arith.truncf %48 : vector<8x16xf32> to vector<8x16xbf16>
    %c0_23 = arith.constant 0 : index
    %c0_24 = arith.constant 0 : index
    %c0_25 = arith.constant 0 : index
    %c0_26 = arith.constant 0 : index
    %50 = vector.load %arg9[%c0_23, %c0_24, %c0_25, %c0_26] : memref<1x2x8x16xbf16, #tpu.memory_space<vmem>>, vector<1x1x8x16xbf16>
    %51 = vector.shape_cast %50 : vector<1x1x8x16xbf16> to vector<8x16xbf16>
    %52 = vector.shape_cast %49 : vector<8x16xbf16> to vector<1x1x8x16xbf16>
    tpu.vector_store %arg9[%c0_23, %c0_24, %c0_25, %c0_26], %52 {strides = array<i32>} : memref<1x2x8x16xbf16, #tpu.memory_space<vmem>>, vector<1x1x8x16xbf16>,
    %53 = vector.extract_strided_slice %37 {offsets = [0, 16], sizes = [8, 16], strides = [1, 1]} : vector<8x96xf32> to vector<8x16xf32>
    %54 = arith.truncf %53 : vector<8x16xf32> to vector<8x16xbf16>
    %c0_27 = arith.constant 0 : index
    %c1 = arith.constant 1 : index
    %c0_28 = arith.constant 0 : index
    %c0_29 = arith.constant 0 : index
    %55 = vector.load %arg7[%c0_27, %c1, %c0_28, %c0_29] : memref<1x2x8x16xbf16, #tpu.memory_space<vmem>>, vector<1x1x8x16xbf16>
    %56 = vector.shape_cast %55 : vector<1x1x8x16xbf16> to vector<8x16xbf16>
    %57 = vector.shape_cast %54 : vector<8x16xbf16> to vector<1x1x8x16xbf16>
    tpu.vector_store %arg7[%c0_27, %c1, %c0_28, %c0_29], %57 {strides = array<i32>} : memref<1x2x8x16xbf16, #tpu.memory_space<vmem>>, vector<1x1x8x16xbf16>,
    %58 = vector.extract_strided_slice %37 {offsets = [0, 48], sizes = [8, 16], strides = [1, 1]} : vector<8x96xf32> to vector<8x16xf32>
    %59 = arith.truncf %58 : vector<8x16xf32> to vector<8x16xbf16>
    %c0_30 = arith.constant 0 : index
    %c1_31 = arith.constant 1 : index
    %c0_32 = arith.constant 0 : index
    %c0_33 = arith.constant 0 : index
    %60 = vector.load %arg8[%c0_30, %c1_31, %c0_32, %c0_33] : memref<1x2x8x16xbf16, #tpu.memory_space<vmem>>, vector<1x1x8x16xbf16>
    %61 = vector.shape_cast %60 : vector<1x1x8x16xbf16> to vector<8x16xbf16>
    %62 = vector.shape_cast %59 : vector<8x16xbf16> to vector<1x1x8x16xbf16>
    tpu.vector_store %arg8[%c0_30, %c1_31, %c0_32, %c0_33], %62 {strides = array<i32>} : memref<1x2x8x16xbf16, #tpu.memory_space<vmem>>, vector<1x1x8x16xbf16>,
    %63 = vector.extract_strided_slice %37 {offsets = [0, 80], sizes = [8, 16], strides = [1, 1]} : vector<8x96xf32> to vector<8x16xf32>
    %64 = arith.truncf %63 : vector<8x16xf32> to vector<8x16xbf16>
    %c0_34 = arith.constant 0 : index
    %c1_35 = arith.constant 1 : index
    %c0_36 = arith.constant 0 : index
    %c0_37 = arith.constant 0 : index
    %65 = vector.load %arg9[%c0_34, %c1_35, %c0_36, %c0_37] : memref<1x2x8x16xbf16, #tpu.memory_space<vmem>>, vector<1x1x8x16xbf16>
    %66 = vector.shape_cast %65 : vector<1x1x8x16xbf16> to vector<8x16xbf16>
    %67 = vector.shape_cast %64 : vector<8x16xbf16> to vector<1x1x8x16xbf16>
    tpu.vector_store %arg9[%c0_34, %c1_35, %c0_36, %c0_37], %67 {strides = array<i32>} : memref<1x2x8x16xbf16, #tpu.memory_space<vmem>>, vector<1x1x8x16xbf16>,
    return
  }
  func.func @transform_0(%arg0: i32, %arg1: i32) -> (i32, i32, i32) {
    %c0_i32 = arith.constant 0 : i32
    %c0_i32_0 = arith.constant 0 : i32
    return %arg0, %arg1, %c0_i32 : i32, i32, i32
  }
  func.func @transform_1(%arg0: i32, %arg1: i32) -> (i32, i32) {
    %c0_i32 = arith.constant 0 : i32
    %c0_i32_0 = arith.constant 0 : i32
    %c0_i32_1 = arith.constant 0 : i32
    return %c0_i32, %c0_i32_0 : i32, i32
  }
  func.func @transform_2(%arg0: i32, %arg1: i32) -> (i32, i32) {
    %c0_i32 = arith.constant 0 : i32
    %c0_i32_0 = arith.constant 0 : i32
    %c0_i32_1 = arith.constant 0 : i32
    return %c0_i32, %c0_i32_0 : i32, i32
  }
  func.func @transform_3(%arg0: i32, %arg1: i32) -> (i32, i32) {
    %c0_i32 = arith.constant 0 : i32
    %c0_i32_0 = arith.constant 0 : i32
    %c0_i32_1 = arith.constant 0 : i32
    return %c0_i32, %c0_i32_0 : i32, i32
  }
  func.func @transform_4(%arg0: i32, %arg1: i32) -> (i32, i32) {
    %c0_i32 = arith.constant 0 : i32
    %c0_i32_0 = arith.constant 0 : i32
    %c0_i32_1 = arith.constant 0 : i32
    return %c0_i32, %c0_i32_0 : i32, i32
  }
  func.func @transform_5(%arg0: i32, %arg1: i32) -> (i32, i32, i32, i32) {
    %c0_i32 = arith.constant 0 : i32
    %c0_i32_0 = arith.constant 0 : i32
    %c0_i32_1 = arith.constant 0 : i32
    return %arg0, %c0_i32, %arg1, %c0_i32_0 : i32, i32, i32, i32
  }
  func.func @transform_6(%arg0: i32, %arg1: i32) -> (i32, i32, i32, i32) {
    %c0_i32 = arith.constant 0 : i32
    %c0_i32_0 = arith.constant 0 : i32
    %c0_i32_1 = arith.constant 0 : i32
    return %arg0, %c0_i32, %arg1, %c0_i32_0 : i32, i32, i32, i32
  }
  func.func @transform_7(%arg0: i32, %arg1: i32) -> (i32, i32, i32, i32) {
    %c0_i32 = arith.constant 0 : i32
    %c0_i32_0 = arith.constant 0 : i32
    %c0_i32_1 = arith.constant 0 : i32
    return %arg0, %c0_i32, %arg1, %c0_i32_0 : i32, i32, i32, i32
  }
}

</mosaic_0001>

<llo_original>
// kernel: tpu_custom_call.1
$region0: #{tpu_custom_call.1}
  #allocation0 [shape = 'u32[]', space=smem, size = 0x4, offset = 0x4, fixed_abs, tag = 'smem constant byte address 0x4 - core index']
  #allocation1 [shape = 'u32[144,128]{1,0:T(1,128)}', space=vmem, size = 0x12000, scoped, tag = 'internal scratch']
  %s0 = inlined_call_operand.hbm [shape: f32[2,8,32], index: 0, kind: input, shape index: {}]
  %s1 = inlined_call_operand.hbm [shape: f32[1,32], index: 1, kind: input, shape index: {}]
  %s2 = inlined_call_operand.hbm [shape: f32[1,32], index: 2, kind: input, shape index: {}]
  %s3 = inlined_call_operand.hbm [shape: bf16[32,96], index: 3, kind: input, shape index: {}]
  %s4 = inlined_call_operand.hbm [shape: f32[1,96], index: 4, kind: input, shape index: {}]
  %s5 = inlined_call_operand.hbm [shape: bf16[2,2,8,16], index: 5, kind: output, shape index: {0}]
  %s6 = inlined_call_operand.hbm [shape: bf16[2,2,8,16], index: 6, kind: output, shape index: {1}]
  %s7 = inlined_call_operand.hbm [shape: bf16[2,2,8,16], index: 7, kind: output, shape index: {2}]
  %8 = xla_tuple %s5, %s6, %s7
  %s9 = sld [smem:[#allocation0]]
  $region89: #{tpu_custom_call.1} parent=0
    _
  %s11 = ssub.s32 1, %s9
  %s12 = scalar_select 0, %s11, %s9
  $region1: #{tpu_custom_call.1} parent=0
    #allocation2 [shape = 'u8[8192]{0}', space=vmem, size = 0x2000, scoped, tag = 'input window, operand 0']
    #allocation3 [shape = 's32[2]{0}', space=sflag, size = 0x8, scoped, tag = 'scoped memory for tpu_custom_call.1']
    #allocation4 [shape = 's32[2]{0}', space=sflag, size = 0x8, scoped, tag = 'scoped memory for tpu_custom_call.1']
    #allocation5 [shape = 'u8[512]{0}', space=vmem, size = 0x400, scoped, tag = 'input window, operand 1, single buffered']
    #allocation6 [shape = 's32[1]{0}', space=sflag, size = 0x4, scoped, tag = 'scoped memory for tpu_custom_call.1']
    #allocation7 [shape = 'u8[512]{0}', space=vmem, size = 0x400, scoped, tag = 'input window, operand 2, single buffered']
    #allocation8 [shape = 'u8[8192]{0}', space=vmem, size = 0x2000, scoped, tag = 'input window, operand 3, single buffered']
    #allocation9 [shape = 's32[1]{0}', space=sflag, size = 0x4, scoped, tag = 'scoped memory for tpu_custom_call.1']
    #allocation10 [shape = 'u8[512]{0}', space=vmem, size = 0x400, scoped, tag = 'input window, operand 4, single buffered']
    #allocation11 [shape = 'u8[8192]{0}', space=vmem, size = 0x2000, scoped, tag = 'output window, operand 0']
    #allocation12 [shape = 'u8[8192]{0}', space=vmem, size = 0x2000, scoped, tag = 'output window, operand 1']
    #allocation13 [shape = 's32[2]{0}', space=sflag, size = 0x8, scoped, tag = 'scoped memory for tpu_custom_call.1']
    #allocation14 [shape = 'u8[8192]{0}', space=vmem, size = 0x2000, scoped, tag = 'output window, operand 2']
    %13 = vsyncpa [#allocation3], 0
    %s14 = scalar_lea.sflag [#allocation3], 1
    %15 = vsyncpa %s14, 0
    %16 = vsyncpa [#allocation6], 0
    %17 = vsyncpa [#allocation9], 0
    %18 = vsyncpa [#allocation4], 0
    %s19 = scalar_lea.sflag [#allocation4], 1
    %20 = vsyncpa %s19, 0
    %21 = vsyncpa [#allocation13], 0
    %s22 = scalar_lea.sflag [#allocation13], 1
    %23 = vsyncpa %s22, 0
    loop: start=0, step=1, limit=4
    $region2: #{tpu_custom_call.1} parent=1 // loop_pre_header
      _
    $region3: #{tpu_custom_call.1} parent=1 // loop_header
      %s25 = sphi 0, %s29
      %p26 = scmp.ge.s32.totalorder %s25, 4
      %s32 = sphi 0, %s44
      %s33 = sphi 0, %s40
      %s34 = sphi 0, %s32
      %s35 = sphi 0, %s33
      %s36 = sphi 0, %s34
      %s37 = sphi 0, %s35
      %s49 = sphi 0, %s51
      %s52 = sphi 0, %s49
      %s53 = sphi 0, %s52
      %s69 = sphi 0, %s53
      %s73 = sphi 0, %s73
      %s75 = sphi 0, %s73
      %s76 = sphi 0, %s75
      %s90 = sphi 0, %s76
      %s94 = sphi 0, %s94
      %s96 = sphi 0, %s94
      %s97 = sphi 0, %s96
      %s111 = sphi 0, %s97
      %s115 = sphi 0, %s115
      %s117 = sphi 0, %s115
      %s118 = sphi 0, %s117
      %s132 = sphi 0, %s118
      %s136 = sphi 0, %s136
      %s138 = sphi 0, %s136
      %s139 = sphi 0, %s138
      %s153 = sphi 0, %s139
      %s161 = sphi 0, %s163
      %s164 = sphi 0, %s161
      %s165 = sphi 0, %s164
      %s181 = sphi 0, %s165
      %s189 = sphi 0, %s191
      %s192 = sphi 0, %s189
      %s193 = sphi 0, %s192
      %s209 = sphi 0, %s193
      %s217 = sphi 0, %s219
      %s220 = sphi 0, %s217
      %s221 = sphi 0, %s220
      %s237 = sphi 0, %s221
    $region4: #{tpu_custom_call.1} parent=1 // loop_header_branch
      %28 = sbr.rel (%p26) target = $region8
    $region5: #{tpu_custom_call.1} parent=1 // loop_body
      %s30 = ssub.s32 %s25, 1
      %s31 = ssub.s32 %s25, 2
      %s38 = sadd.s32 1, %s33
      %p39 = scmp.ge.s32.totalorder %s38, 1
      %s40 = scalar_select %p39, 0, %s38
      %s41 = sadd.s32 1, %s32
      %s42 = scalar_select %p39, %s41, %s32
      %p43 = scmp.ge.s32.totalorder %s42, 2
      %s44 = scalar_select %p43, 0, %s42
      %s45 = ssub.s32 %s32, %s44
      %s46 = ssub.s32 %s33, %s40
      %s47 = sor.u32 %s45, %s46
      %p48 = scmp.eq.s32.totalorder %s47, 0
      %s50 = sadd.s32 %s49, 1
      %s51 = scalar_select %p48, %s49, %s50
      %p54 = pneg %p48
      %p55 = scmp.eq.s32.totalorder %s25, 1
      %p56 = por %p54, %p55
      %p57 = scmp.ne.s32.totalorder %s49, %s52
      %p58 = scmp.eq.s32.totalorder %s25, 0
      %p59 = por %p57, %p58
      %p60 = scmp.ne.s32.totalorder %s49, %s52
      %p61 = scmp.eq.s32.totalorder %s30, 1
      %p62 = por %p60, %p61
      %p63 = scmp.ne.s32.totalorder %s52, %s53
      %p64 = scmp.eq.s32.totalorder %s30, 0
      %p65 = por %p63, %p64
      %p66 = scmp.ne.s32.totalorder %s52, %s53
      %p67 = scmp.eq.s32.totalorder %s31, 1
      %p68 = por %p66, %p67
      %p70 = scmp.ne.s32.totalorder %s53, %s69
      %p71 = scmp.eq.s32.totalorder %s31, 0
      %p72 = por %p70, %p71
      %s74 = sadd.s32 %s73, 1
      %p77 = scmp.eq.s32.totalorder %s25, 1
      %p78 = scmp.ne.s32.totalorder %s73, %s75
      %p79 = scmp.eq.s32.totalorder %s25, 0
      %p80 = por %p78, %p79
      %p81 = scmp.ne.s32.totalorder %s73, %s75
      %p82 = scmp.eq.s32.totalorder %s30, 1
      %p83 = por %p81, %p82
      %p84 = scmp.ne.s32.totalorder %s75, %s76
      %p85 = scmp.eq.s32.totalorder %s30, 0
      %p86 = por %p84, %p85
      %p87 = scmp.ne.s32.totalorder %s75, %s76
      %p88 = scmp.eq.s32.totalorder %s31, 1
      %p89 = por %p87, %p88
      %p91 = scmp.ne.s32.totalorder %s76, %s90
      %p92 = scmp.eq.s32.totalorder %s31, 0
      %p93 = por %p91, %p92
      %s95 = sadd.s32 %s94, 1
      %p98 = scmp.eq.s32.totalorder %s25, 1
      %p99 = scmp.ne.s32.totalorder %s94, %s96
      %p100 = scmp.eq.s32.totalorder %s25, 0
      %p101 = por %p99, %p100
      %p102 = scmp.ne.s32.totalorder %s94, %s96
      %p103 = scmp.eq.s32.totalorder %s30, 1
      %p104 = por %p102, %p103
      %p105 = scmp.ne.s32.totalorder %s96, %s97
      %p106 = scmp.eq.s32.totalorder %s30, 0
      %p107 = por %p105, %p106
      %p108 = scmp.ne.s32.totalorder %s96, %s97
      %p109 = scmp.eq.s32.totalorder %s31, 1
      %p110 = por %p108, %p109
      %p112 = scmp.ne.s32.totalorder %s97, %s111
      %p113 = scmp.eq.s32.totalorder %s31, 0
      %p114 = por %p112, %p113
      %s116 = sadd.s32 %s115, 1
      %p119 = scmp.eq.s32.totalorder %s25, 1
      %p120 = scmp.ne.s32.totalorder %s115, %s117
      %p121 = scmp.eq.s32.totalorder %s25, 0
      %p122 = por %p120, %p121
      %p123 = scmp.ne.s32.totalorder %s115, %s117
      %p124 = scmp.eq.s32.totalorder %s30, 1
      %p125 = por %p123, %p124
      %p126 = scmp.ne.s32.totalorder %s117, %s118
      %p127 = scmp.eq.s32.totalorder %s30, 0
      %p128 = por %p126, %p127
      %p129 = scmp.ne.s32.totalorder %s117, %s118
      %p130 = scmp.eq.s32.totalorder %s31, 1
      %p131 = por %p129, %p130
      %p133 = scmp.ne.s32.totalorder %s118, %s132
      %p134 = scmp.eq.s32.totalorder %s31, 0
      %p135 = por %p133, %p134
      %s137 = sadd.s32 %s136, 1
      %p140 = scmp.eq.s32.totalorder %s25, 1
      %p141 = scmp.ne.s32.totalorder %s136, %s138
      %p142 = scmp.eq.s32.totalorder %s25, 0
      %p143 = por %p141, %p142
      %p144 = scmp.ne.s32.totalorder %s136, %s138
      %p145 = scmp.eq.s32.totalorder %s30, 1
      %p146 = por %p144, %p145
      %p147 = scmp.ne.s32.totalorder %s138, %s139
      %p148 = scmp.eq.s32.totalorder %s30, 0
      %p149 = por %p147, %p148
      %p150 = scmp.ne.s32.totalorder %s138, %s139
      %p151 = scmp.eq.s32.totalorder %s31, 1
      %p152 = por %p150, %p151
      %p154 = scmp.ne.s32.totalorder %s139, %s153
      %p155 = scmp.eq.s32.totalorder %s31, 0
      %p156 = por %p154, %p155
      %s157 = ssub.s32 %s32, %s44
      %s158 = ssub.s32 %s33, %s40
      %s159 = sor.u32 %s157, %s158
      %p160 = scmp.eq.s32.totalorder %s159, 0
      %s162 = sadd.s32 %s161, 1
      %s163 = scalar_select %p160, %s161, %s162
      %p166 = pneg %p160
      %p167 = scmp.eq.s32.totalorder %s25, 1
      %p168 = por %p166, %p167
      %p169 = scmp.ne.s32.totalorder %s161, %s164
      %p170 = scmp.eq.s32.totalorder %s25, 0
      %p171 = por %p169, %p170
      %p172 = scmp.ne.s32.totalorder %s161, %s164
      %p173 = scmp.eq.s32.totalorder %s30, 1
      %p174 = por %p172, %p173
      %p175 = scmp.ne.s32.totalorder %s164, %s165
      %p176 = scmp.eq.s32.totalorder %s30, 0
      %p177 = por %p175, %p176
      %p178 = scmp.ne.s32.totalorder %s164, %s165
      %p179 = scmp.eq.s32.totalorder %s31, 1
      %p180 = por %p178, %p179
      %p182 = scmp.ne.s32.totalorder %s165, %s181
      %p183 = scmp.eq.s32.totalorder %s31, 0
      %p184 = por %p182, %p183
      %s185 = ssub.s32 %s32, %s44
      %s186 = ssub.s32 %s33, %s40
      %s187 = sor.u32 %s185, %s186
      %p188 = scmp.eq.s32.totalorder %s187, 0
      %s190 = sadd.s32 %s189, 1
      %s191 = scalar_select %p188, %s189, %s190
      %p194 = pneg %p188
      %p195 = scmp.eq.s32.totalorder %s25, 1
      %p196 = por %p194, %p195
      %p197 = scmp.ne.s32.totalorder %s189, %s192
      %p198 = scmp.eq.s32.totalorder %s25, 0
      %p199 = por %p197, %p198
      %p200 = scmp.ne.s32.totalorder %s189, %s192
      %p201 = scmp.eq.s32.totalorder %s30, 1
      %p202 = por %p200, %p201
      %p203 = scmp.ne.s32.totalorder %s192, %s193
      %p204 = scmp.eq.s32.totalorder %s30, 0
      %p205 = por %p203, %p204
      %p206 = scmp.ne.s32.totalorder %s192, %s193
      %p207 = scmp.eq.s32.totalorder %s31, 1
      %p208 = por %p206, %p207
      %p210 = scmp.ne.s32.totalorder %s193, %s209
      %p211 = scmp.eq.s32.totalorder %s31, 0
      %p212 = por %p210, %p211
      %s213 = ssub.s32 %s32, %s44
      %s214 = ssub.s32 %s33, %s40
      %s215 = sor.u32 %s213, %s214
      %p216 = scmp.eq.s32.totalorder %s215, 0
      %s218 = sadd.s32 %s217, 1
      %s219 = scalar_select %p216, %s217, %s218
      %p222 = pneg %p216
      %p223 = scmp.eq.s32.totalorder %s25, 1
      %p224 = por %p222, %p223
      %p225 = scmp.ne.s32.totalorder %s217, %s220
      %p226 = scmp.eq.s32.totalorder %s25, 0
      %p227 = por %p225, %p226
      %p228 = scmp.ne.s32.totalorder %s217, %s220
      %p229 = scmp.eq.s32.totalorder %s30, 1
      %p230 = por %p228, %p229
      %p231 = scmp.ne.s32.totalorder %s220, %s221
      %p232 = scmp.eq.s32.totalorder %s30, 0
      %p233 = por %p231, %p232
      %p234 = scmp.ne.s32.totalorder %s220, %s221
      %p235 = scmp.eq.s32.totalorder %s31, 1
      %p236 = por %p234, %p235
      %p238 = scmp.ne.s32.totalorder %s221, %s237
      %p239 = scmp.eq.s32.totalorder %s31, 0
      %p240 = por %p238, %p239
      %p241 = scmp.le.s32.totalorder 1, %s25
      %p242 = scmp.lt.s32.totalorder %s25, 3
      %p243 = pnand %p241, %p242
      %p244 = pneg %p243
      // Predicated region
      $region9: #{tpu_custom_call.1} parent=5 // pred_check
        _
      $region10: #{tpu_custom_call.1} parent=5 // pred_check_branch
        %246 = sbr.rel (%p243) target = $region12
      $region11: #{tpu_custom_call.1} parent=5 // pred_region
        %s247 = ssub.s32 %s25, 1
        // Predicated region
        $region13: #{tpu_custom_call.1} parent=11 // pred_check
          %p248 = pneg %p86
        $region14: #{tpu_custom_call.1} parent=11 // pred_check_branch
          %250 = sbr.rel (%p248) target = $region16
        $region15: #{tpu_custom_call.1} parent=11 // pred_region
          %s252 = ssub.s32 16, 16
          %253 = vsyncadd [#allocation6], %s252
          %s255 = sshll.u32 [#allocation5], 4
          %s256 = int_to_ptr.vmem [resolvable:$true] %s255
          %258 = dma.hbm_to_vmem [thread:$0]  %s1, 16, %s256, [#allocation6]
        $region16: #{tpu_custom_call.1} parent=11 // pred_fallthru
          _
        // Predicated region
        $region17: #{tpu_custom_call.1} parent=11 // pred_check
          %p259 = pneg %p107
        $region18: #{tpu_custom_call.1} parent=11 // pred_check_branch
          %261 = sbr.rel (%p259) target = $region20
        $region19: #{tpu_custom_call.1} parent=11 // pred_region
          %s263 = ssub.s32 16, 16
          %264 = vsyncadd [#allocation6], %s263
          %s266 = sshll.u32 [#allocation7], 4
          %s267 = int_to_ptr.vmem [resolvable:$true] %s266
          %269 = dma.hbm_to_vmem [thread:$0]  %s2, 16, %s267, [#allocation6]
        $region20: #{tpu_custom_call.1} parent=11 // pred_fallthru
          _
        // Predicated region
        $region21: #{tpu_custom_call.1} parent=11 // pred_check
          %p270 = pneg %p128
        $region22: #{tpu_custom_call.1} parent=11 // pred_check_branch
          %272 = sbr.rel (%p270) target = $region24
        $region23: #{tpu_custom_call.1} parent=11 // pred_region
          %s274 = ssub.s32 256, 256
          %275 = vsyncadd [#allocation9], %s274
          %s276 = sshll.u32 [#allocation8], 4
          %s277 = int_to_ptr.vmem [resolvable:$true] %s276
          %282 = dma.hbm_to_vmem [thread:$0]  %s3, 256, %s277, [#allocation9], 64, 64, 4
        $region24: #{tpu_custom_call.1} parent=11 // pred_fallthru
          _
        // Predicated region
        $region25: #{tpu_custom_call.1} parent=11 // pred_check
          %p283 = pneg %p149
        $region26: #{tpu_custom_call.1} parent=11 // pred_check_branch
          %285 = sbr.rel (%p283) target = $region28
        $region27: #{tpu_custom_call.1} parent=11 // pred_region
          %s287 = ssub.s32 16, 16
          %288 = vsyncadd [#allocation9], %s287
          %s290 = sshll.u32 [#allocation10], 4
          %s291 = int_to_ptr.vmem [resolvable:$true] %s290
          %293 = dma.hbm_to_vmem [thread:$0]  %s4, 16, %s291, [#allocation9]
        $region28: #{tpu_custom_call.1} parent=11 // pred_fallthru
          _
      $region12: #{tpu_custom_call.1} parent=5 // pred_fallthru
        _
      %p294 = scmp.lt.s32.totalorder %s25, 2
      // Predicated region
      $region29: #{tpu_custom_call.1} parent=5 // pred_check
        %p295 = pneg %p294
      $region30: #{tpu_custom_call.1} parent=5 // pred_check_branch
        %297 = sbr.rel (%p295) target = $region32
      $region31: #{tpu_custom_call.1} parent=5 // pred_region
        // Predicated region
        $region33: #{tpu_custom_call.1} parent=31 // pred_check
          %p298 = pneg %p59
        $region34: #{tpu_custom_call.1} parent=31 // pred_check_branch
          %300 = sbr.rel (%p298) target = $region36
        $region35: #{tpu_custom_call.1} parent=31 // pred_region
          %s301 = sand.u32 %s49, 1
          %s302 = scalar_lea.sflag [#allocation3], %s301
          %s303 = sand.u32 %s49, 1
          %s304 = smul.addr %s303, 8
          %s305 = scalar_lea.vmem [#allocation2], %s304
          %s307 = ssub.s32 128, 128
          %308 = vsyncadd %s302, %s307
          %s309 = sadd.s32 %s33, %s32
          %s310 = smul.addr %s309, 128
          %s311 = scalar_lea.hbm %s0, %s310
          %s313 = sshll.u32 %s305, 4
          %s314 = int_to_ptr.vmem [resolvable:$true] %s313
          %316 = dma.hbm_to_vmem [thread:$0]  %s311, 128, %s314, %s302
        $region36: #{tpu_custom_call.1} parent=31 // pred_fallthru
          _
      $region32: #{tpu_custom_call.1} parent=5 // pred_fallthru
        _
      %p317 = scmp.le.s32.totalorder 1, %s25
      %p318 = scmp.lt.s32.totalorder %s25, 3
      %p319 = pnand %p317, %p318
      %p320 = pneg %p319
      // Predicated region
      $region37: #{tpu_custom_call.1} parent=5 // pred_check
        _
      $region38: #{tpu_custom_call.1} parent=5 // pred_check_branch
        %322 = sbr.rel (%p319) target = $region40
      $region39: #{tpu_custom_call.1} parent=5 // pred_region
        %s323 = ssub.s32 %s25, 1
        %s324 = sand.u32 %s52, 1
        %s325 = scalar_lea.sflag [#allocation3], %s324
        %s326 = sand.u32 %s52, 1
        %s327 = smul.addr %s326, 8
        %s328 = scalar_lea.vmem [#allocation2], %s327
        // Predicated region
        $region41: #{tpu_custom_call.1} parent=39 // pred_check
          %p329 = pneg %p65
        $region42: #{tpu_custom_call.1} parent=39 // pred_check_branch
          %331 = sbr.rel (%p329) target = $region44
        $region43: #{tpu_custom_call.1} parent=39 // pred_region
          %332 = dma.done %s325, 128
        $region44: #{tpu_custom_call.1} parent=39 // pred_fallthru
          _
        // Predicated region
        $region45: #{tpu_custom_call.1} parent=39 // pred_check
          %p333 = pneg %p86
        $region46: #{tpu_custom_call.1} parent=39 // pred_check_branch
          %335 = sbr.rel (%p333) target = $region48
        $region47: #{tpu_custom_call.1} parent=39 // pred_region
          %336 = dma.done [#allocation6], 16
        $region48: #{tpu_custom_call.1} parent=39 // pred_fallthru
          _
        // Predicated region
        $region49: #{tpu_custom_call.1} parent=39 // pred_check
          %p337 = pneg %p107
        $region50: #{tpu_custom_call.1} parent=39 // pred_check_branch
          %339 = sbr.rel (%p337) target = $region52
        $region51: #{tpu_custom_call.1} parent=39 // pred_region
          %340 = dma.done [#allocation6], 16
        $region52: #{tpu_custom_call.1} parent=39 // pred_fallthru
          _
        // Predicated region
        $region53: #{tpu_custom_call.1} parent=39 // pred_check
          %p341 = pneg %p128
        $region54: #{tpu_custom_call.1} parent=39 // pred_check_branch
          %343 = sbr.rel (%p341) target = $region56
        $region55: #{tpu_custom_call.1} parent=39 // pred_region
          %344 = dma.done [#allocation9], 256
        $region56: #{tpu_custom_call.1} parent=39 // pred_fallthru
          _
        // Predicated region
        $region57: #{tpu_custom_call.1} parent=39 // pred_check
          %p345 = pneg %p149
        $region58: #{tpu_custom_call.1} parent=39 // pred_check_branch
          %347 = sbr.rel (%p345) target = $region60
        $region59: #{tpu_custom_call.1} parent=39 // pred_region
          %348 = dma.done [#allocation9], 16
        $region60: #{tpu_custom_call.1} parent=39 // pred_fallthru
          _
        %s349 = sand.u32 %s52, 1
        %s350 = scalar_lea.sflag [#allocation3], %s349
        %s351 = sand.u32 %s52, 1
        %s352 = smul.addr %s351, 8
        %s353 = scalar_lea.vmem [#allocation2], %s352
        %p354 = pneg %p65
        %p355 = pneg %p62
        %p356 = pneg %p86
        %p357 = pneg %p83
        %p358 = pneg %p107
        %p359 = pneg %p104
        %p360 = pneg %p128
        %p361 = pneg %p125
        %p362 = pneg %p149
        %p363 = pneg %p146
        %p364 = pneg %p177
        %p365 = pneg %p174
        %s366 = sand.u32 %s164, 1
        %s367 = scalar_lea.sflag [#allocation4], %s366
        %s368 = sand.u32 %s164, 1
        %s369 = smul.addr %s368, 8
        %s370 = scalar_lea.vmem [#allocation11], %s369
        %p371 = pneg %p205
        %p372 = pneg %p202
        %s373 = sand.u32 %s30, 1
        %s374 = scalar_lea.sflag [#allocation13], %s373
        %s375 = sand.u32 %s192, 1
        %s376 = smul.addr %s375, 8
        %s377 = scalar_lea.vmem [#allocation12], %s376
        %p378 = pneg %p233
        %p379 = pneg %p230
        %s380 = sand.u32 %s30, 1
        %s381 = scalar_lea.sflag [#allocation13], %s380
        %s382 = sand.u32 %s220, 1
        %s383 = smul.addr %s382, 8
        %s384 = scalar_lea.vmem [#allocation14], %s383
        %v386 = vld [vmem:[%s328] sm:$0xff]
        %v387 = vld [vmem:[#allocation5] sm:$0x1]
        %v388 = vld [vmem:[#allocation7] sm:$0x1]
        %vm389 = vcmask 261120
        %v390 = vsel %vm389, %v386, 0.0
        %391 = vadd.xlane.f32.xlu0 %v390
        %v392 = vpop.xlane.xlu0 %391
        %v393 = vrcp.pop 32.0
        %v394 = vmul.f32 %v392, %v393
        %v395 = vsub.f32 %v386, %v394
        %v396 = vmul.f32 %v395, %v395
        %v397 = vsel %vm389, %v396, 0.0
        %398 = vadd.xlane.f32.xlu0 %v397
        %v399 = vpop.xlane.xlu0 %398
        %v400 = vmul.f32 %v399, %v393
        %v401 = vadd.f32 %v400, 1e-05
        %v402 = vrsqrt.pop %v401
        %v403 = vmul.f32 %v395, %v402
        %v405 = vlaneseq
        %v406 = vshrl.u32 %v405, 7
        %v407 = vsub.s32 0, %v406
        %v408 = vrot.slane %v387, %v407
        %v410 = vmul.f32 %v403, %v408
        %v412 = vlaneseq
        %v413 = vshrl.u32 %v412, 7
        %v414 = vsub.s32 0, %v413
        %v415 = vrot.slane %v388, %v414
        %v417 = vadd.f32 %v410, %v415
        %v418 = vpack.c.bf16 %v417, %v417
        %v419 = vld [vmem:[#allocation8] sm:$0xf]
        %v420 = vld [vmem:[#allocation8 + $0x4] sm:$0xf]
        %v421 = vld [vmem:[#allocation8 + $0x8] sm:$0xf]
        %v422 = vld [vmem:[#allocation8 + $0xc] sm:$0xf]
        %v423 = vld [vmem:[#allocation10] sm:$0x1]
        %v425 = vlaneseq
        %v426 = vshrl.u32 %v425, 7
        %v427 = vsub.s32 0, %v426
        %v428 = vrot.slane %v423, %v427
        %v434 = vunpack.c.l.b16 %v419
        %v435 = vunpack.c.l.b16 %v420
        %v436 = vunpack.c.l.b16 %v421
        %v437 = vunpack.c.l.b16 %v422
        %v438 = vpack.c.b16 %v435, %v434
        %v439 = vpack.c.b16 %v437, %v436
        %v443 = vsel %vm389, %v418, 0
        %445 = vmatprep.subr.bf16.mxu0 0
        %446 = vmatpush1.bf16.msra.mxu0 %v438
        %447 = vmatprep.subr.bf16.mxu0 0
        %448 = vmatpush1.bf16.msra.mxu0 %v439
        %449 = vmatprep.subr.bf16.mxu0 0
        %450 = vmatpush1.bf16.msra.mxu0 0
        %451 = vmatprep.subr.bf16.mxu0 0
        %452 = vmatpush1.bf16.msra.mxu0 0
        %453 = vmatprep.subr.bf16.mxu0 0
        %454 = vmatpush1.bf16.msra.mxu0 0
        %455 = vmatprep.subr.bf16.mxu0 0
        %456 = vmatpush1.bf16.msra.mxu0 0
        %457 = vmatprep.subr.bf16.mxu0 0
        %458 = vmatpush1.bf16.msra.mxu0 0
        %459 = vmatprep.subr.bf16.mxu0 0
        %460 = vmatpush1.bf16.msra.mxu0 0
        %461 = vmatprep.subr.bf16.mxu0 0
        %462 = vmatpush1.bf16.msra.mxu0 0
        %463 = vmatprep.subr.bf16.mxu0 0
        %464 = vmatpush1.bf16.msra.mxu0 0
        %465 = vmatprep.subr.bf16.mxu0 0
        %466 = vmatpush1.bf16.msra.mxu0 0
        %467 = vmatprep.subr.bf16.mxu0 0
        %468 = vmatpush1.bf16.msra.mxu0 0
        %469 = vmatprep.subr.bf16.mxu0 0
        %470 = vmatpush1.bf16.msra.mxu0 0
        %471 = vmatprep.subr.bf16.mxu0 0
        %472 = vmatpush1.bf16.msra.mxu0 0
        %473 = vmatprep.subr.bf16.mxu0 0
        %474 = vmatpush1.bf16.msra.mxu0 0
        %475 = vmatprep.subr.bf16.mxu0 0
        %476 = vmatpush1.bf16.msra.mxu0 0
        %477 = vmatprep.mubr.bf16.mxu0 0
        %478 = vmatmul.mubr.bf16.gmra.mrb[0].mxu0 %v443
        %v479 = vpop.f32.mrb[0].mxu0
        %v480 = vadd.f32 %v428, %v479
        %v481 = vpop.f32.mrb[0].mxu0
        %v482 = vpop.f32.mrb[0].mxu0
        %v483 = vpop.f32.mrb[0].mxu0
        %484 = vdwg.mxu0
        %v485 = vpack.c.bf16 %v480, %v480
        %vm486 = vcmask 125952
        %487 = vst.msk [vmem:[%s370] sm:$0xf] %vm486, %v485
        %v489 = vunpack.c.l.b16 %v485
        %v490 = vpack.c.b16 %v489, %v489
        %491 = vrot.lane.b32.xlu0 %v490, 96
        %v492 = vpop.permute.xlu0 %491
        %494 = vst.msk [vmem:[%s377] sm:$0xf] %vm486, %v492
        %495 = vrot.lane.b32.xlu0 %v490, 64
        %v496 = vpop.permute.xlu0 %495
        %498 = vst.msk [vmem:[%s384] sm:$0xf] %vm486, %v496
        %499 = vrot.lane.b32.xlu0 %v490, 112
        %v500 = vpop.permute.xlu0 %499
        %s502 = scalar_lea.vmem %s370, 4 [#allocation11]
        %503 = vst.msk [vmem:[%s502] sm:$0xf] %vm486, %v500
        %504 = vrot.lane.b32.xlu0 %v490, 80
        %v505 = vpop.permute.xlu0 %504
        %s507 = scalar_lea.vmem %s377, 4 [#allocation12]
        %508 = vst.msk [vmem:[%s507] sm:$0xf] %vm486, %v505
        %509 = vrot.lane.b32.xlu0 %v490, 48
        %v510 = vpop.permute.xlu0 %509
        %s512 = scalar_lea.vmem %s384, 4 [#allocation14]
        %513 = vst.msk [vmem:[%s512] sm:$0xf] %vm486, %v510
        %s514 = sand.u32 %s164, 1
        %s515 = scalar_lea.sflag [#allocation4], %s514
        %s516 = sand.u32 %s164, 1
        %s517 = smul.addr %s516, 8
        %s518 = scalar_lea.vmem [#allocation11], %s517
        %s519 = sand.u32 %s30, 1
        %s520 = scalar_lea.sflag [#allocation13], %s519
        %s521 = sand.u32 %s192, 1
        %s522 = smul.addr %s521, 8
        %s523 = scalar_lea.vmem [#allocation12], %s522
        %s524 = sand.u32 %s30, 1
        %s525 = scalar_lea.sflag [#allocation13], %s524
        %s526 = sand.u32 %s220, 1
        %s527 = smul.addr %s526, 8
        %s528 = scalar_lea.vmem [#allocation14], %s527
        // Predicated region
        $region61: #{tpu_custom_call.1} parent=39 // pred_check
          %p529 = pneg %p174
        $region62: #{tpu_custom_call.1} parent=39 // pred_check_branch
          %531 = sbr.rel (%p529) target = $region64
        $region63: #{tpu_custom_call.1} parent=39 // pred_region
          %s533 = ssub.s32 128, 128
          %534 = vsyncadd %s515, %s533
          %s535 = smul.addr %s34, 2
          %s536 = sadd.s32 %s35, %s535
          %s537 = smul.addr %s536, 64
          %s538 = scalar_lea.hbm %s5, %s537
          %s539 = sshll.u32 %s518, 4
          %s540 = int_to_ptr.vmem [resolvable:$true] %s539
          %545 = dma.vmem_to_hbm [thread:$0]  %s540, 128, %s538, %s515, 64, 64, 4
        $region64: #{tpu_custom_call.1} parent=39 // pred_fallthru
          _
        // Predicated region
        $region65: #{tpu_custom_call.1} parent=39 // pred_check
          %p546 = pneg %p202
        $region66: #{tpu_custom_call.1} parent=39 // pred_check_branch
          %548 = sbr.rel (%p546) target = $region68
        $region67: #{tpu_custom_call.1} parent=39 // pred_region
          %s550 = ssub.s32 128, 128
          %551 = vsyncadd %s520, %s550
          %s552 = smul.addr %s34, 2
          %s553 = sadd.s32 %s35, %s552
          %s554 = smul.addr %s553, 64
          %s555 = scalar_lea.hbm %s6, %s554
          %s556 = sshll.u32 %s523, 4
          %s557 = int_to_ptr.vmem [resolvable:$true] %s556
          %562 = dma.vmem_to_hbm [thread:$0]  %s557, 128, %s555, %s520, 64, 64, 4
        $region68: #{tpu_custom_call.1} parent=39 // pred_fallthru
          _
        // Predicated region
        $region69: #{tpu_custom_call.1} parent=39 // pred_check
          %p563 = pneg %p230
        $region70: #{tpu_custom_call.1} parent=39 // pred_check_branch
          %565 = sbr.rel (%p563) target = $region72
        $region71: #{tpu_custom_call.1} parent=39 // pred_region
          %s567 = ssub.s32 128, 128
          %568 = vsyncadd %s525, %s567
          %s569 = smul.addr %s34, 2
          %s570 = sadd.s32 %s35, %s569
          %s571 = smul.addr %s570, 64
          %s572 = scalar_lea.hbm %s7, %s571
          %s573 = sshll.u32 %s528, 4
          %s574 = int_to_ptr.vmem [resolvable:$true] %s573
          %579 = dma.vmem_to_hbm [thread:$0]  %s574, 128, %s572, %s525, 64, 64, 4
        $region72: #{tpu_custom_call.1} parent=39 // pred_fallthru
          _
      $region40: #{tpu_custom_call.1} parent=5 // pred_fallthru
        _
      %p580 = scmp.le.s32.totalorder 2, %s25
      // Predicated region
      $region73: #{tpu_custom_call.1} parent=5 // pred_check
        %p581 = pneg %p580
      $region74: #{tpu_custom_call.1} parent=5 // pred_check_branch
        %583 = sbr.rel (%p581) target = $region76
      $region75: #{tpu_custom_call.1} parent=5 // pred_region
        %s584 = ssub.s32 %s25, 2
        // Predicated region
        $region77: #{tpu_custom_call.1} parent=75 // pred_check
          %p585 = pneg %p180
        $region78: #{tpu_custom_call.1} parent=75 // pred_check_branch
          %587 = sbr.rel (%p585) target = $region80
        $region79: #{tpu_custom_call.1} parent=75 // pred_region
          %s588 = sand.u32 %s165, 1
          %s589 = scalar_lea.sflag [#allocation4], %s588
          %s590 = sand.u32 %s165, 1
          %s591 = smul.addr %s590, 8
          %s592 = scalar_lea.vmem [#allocation11], %s591
          %593 = dma.done %s589, 128
        $region80: #{tpu_custom_call.1} parent=75 // pred_fallthru
          _
        // Predicated region
        $region81: #{tpu_custom_call.1} parent=75 // pred_check
          %p594 = pneg %p208
        $region82: #{tpu_custom_call.1} parent=75 // pred_check_branch
          %596 = sbr.rel (%p594) target = $region84
        $region83: #{tpu_custom_call.1} parent=75 // pred_region
          %s597 = sand.u32 %s31, 1
          %s598 = scalar_lea.sflag [#allocation13], %s597
          %s599 = sand.u32 %s193, 1
          %s600 = smul.addr %s599, 8
          %s601 = scalar_lea.vmem [#allocation12], %s600
          %602 = dma.done %s598, 128
        $region84: #{tpu_custom_call.1} parent=75 // pred_fallthru
          _
        // Predicated region
        $region85: #{tpu_custom_call.1} parent=75 // pred_check
          %p603 = pneg %p236
        $region86: #{tpu_custom_call.1} parent=75 // pred_check_branch
          %605 = sbr.rel (%p603) target = $region88
        $region87: #{tpu_custom_call.1} parent=75 // pred_region
          %s606 = sand.u32 %s31, 1
          %s607 = scalar_lea.sflag [#allocation13], %s606
          %s608 = sand.u32 %s221, 1
          %s609 = smul.addr %s608, 8
          %s610 = scalar_lea.vmem [#allocation14], %s609
          %611 = dma.done %s607, 128
        $region88: #{tpu_custom_call.1} parent=75 // pred_fallthru
          _
      $region76: #{tpu_custom_call.1} parent=5 // pred_fallthru
        _
    $region6: #{tpu_custom_call.1} parent=1 // loop_footer
      %s29 = sadd.s32 1, %s25
    $region7: #{tpu_custom_call.1} parent=1 // loop_footer_branch
      %24 = sbr.rel target = $region3
    $region8: #{tpu_custom_call.1} parent=1 // loop_exit
      _
    %612 = vsyncpa [#allocation3], 1
    %s613 = scalar_lea.sflag [#allocation3], 1
    %614 = vsyncpa %s613, 1
    %615 = vsyncpa [#allocation6], 1
    %616 = vsyncpa [#allocation9], 1
    %617 = vsyncpa [#allocation4], 1
    %s618 = scalar_lea.sflag [#allocation4], 1
    %619 = vsyncpa %s618, 1
    %620 = vsyncpa [#allocation13], 1
    %s621 = scalar_lea.sflag [#allocation13], 1
    %622 = vsyncpa %s621, 1

</llo_original>
